<compile_context>
chip_gen: v6e
topology: v6e:2x2x1
jax: 0.10.0
libtpu: 0.0.40
codegen_flags: <defaults>
</compile_context>

<pallas_src>
import functools

import jax
import jax.numpy as jnp
from jax.experimental import pallas as pl
from jax.experimental.pallas import tpu as pltpu


# ----------------------------- Pallas kernel ------------------------------ #

def _spatial_gather_kernel(probs_ref, feats_ref, o_ref, m_ref, l_ref, acc_ref,
                           *, scale):
    """One (batch, spatial-tile) grid step of softmax(scale*probs) @ feats^T.

    probs_ref : (1, K, TS)   class logits for this spatial tile
    feats_ref : (1, C, TS)   features for this spatial tile (bf16)
    o_ref     : (1, K, C)    per-batch output (same block across spatial axis)
    m_ref     : (K, 1)  f32  running max      (online softmax)
    l_ref     : (K, 1)  f32  running denom
    acc_ref   : (K, C)  f32  running weighted sum of features
    """
    s_idx = pl.program_id(1)

    @pl.when(s_idx == 0)
    def _init():
        m_ref[...] = jnp.full_like(m_ref, -jnp.inf)
        l_ref[...] = jnp.zeros_like(l_ref)
        acc_ref[...] = jnp.zeros_like(acc_ref)

    logits = probs_ref[0].astype(jnp.float32)          # (K, TS)
    if scale != 1.0:
        logits = logits * scale

    m_prev = m_ref[...]                                 # (K, 1)
    m_new = jnp.maximum(m_prev, jnp.max(logits, axis=-1, keepdims=True))
    alpha = jnp.exp(m_prev - m_new)                     # (K, 1) rescale factor
    p = jnp.exp(logits - m_new)                         # (K, TS) unnormalized

    l_ref[...] = alpha * l_ref[...] + jnp.sum(p, axis=-1, keepdims=True)

    # (K, TS) x (C, TS) contracted over the spatial (lane) dim -> (K, C).
    # bf16 MXU inputs, f32 accumulation.
    contrib = jax.lax.dot_general(
        p.astype(feats_ref.dtype), feats_ref[0],
        dimension_numbers=(((1,), (1,)), ((), ())),
        preferred_element_type=jnp.float32,
    )
    acc_ref[...] = alpha * acc_ref[...] + contrib
    m_ref[...] = m_new

    @pl.when(s_idx == pl.num_programs(1) - 1)
    def _finalize():
        inv_l = pl.reciprocal(l_ref[...], approx=True)  # EUP slot, ~free
        o_ref[0] = (acc_ref[...] * inv_l).astype(o_ref.dtype)


# ------------------------------- wrapper ----------------------------------- #

def _pick_spatial_tile(hw, max_tile=512):
    """Largest multiple of 128 that divides hw (capped), else the full extent."""
    if hw % 128 == 0:
        for cand in range(min(max_tile, hw), 127, -128):
            if cand % 128 == 0 and hw % cand == 0:
                return cand
    return hw  # full-extent block is always legal


def spatial_gather(feats, probs, *, scale=1.0, compute_dtype=jnp.bfloat16,
                   max_spatial_tile=512):
    """Forward pass of SpatialGather_Module.

    feats: (B, C, H, W), probs: (B, K, H, W)  ->  (B, C, K, 1)
    """
    B, C, H, W = feats.shape
    Bp, K, Hp, Wp = probs.shape
    assert (B, H, W) == (Bp, Hp, Wp), (feats.shape, probs.shape)
    HW = H * W

    # Free reshapes (merge trailing dims) — no layout change / transpose.
    feats_f = feats.reshape(B, C, HW).astype(compute_dtype)
    probs_f = probs.reshape(B, K, HW)

    ts = _pick_spatial_tile(HW, max_spatial_tile)
    grid = (B, HW // ts)

    ctx = pl.pallas_call(
        functools.partial(_spatial_gather_kernel, scale=float(scale)),
        out_shape=jax.ShapeDtypeStruct((B, K, C), jnp.float32),
        grid_spec=pltpu.PrefetchScalarGridSpec(
            num_scalar_prefetch=0,
            grid=grid,
            in_specs=[
                pl.BlockSpec((1, K, ts), lambda b, s: (b, 0, s)),   # probs
                pl.BlockSpec((1, C, ts), lambda b, s: (b, 0, s)),   # feats
            ],
            out_specs=pl.BlockSpec((1, K, C), lambda b, s: (b, 0, 0)),
            scratch_shapes=[
                pltpu.VMEM((K, 1), jnp.float32),   # running max
                pltpu.VMEM((K, 1), jnp.float32),   # running denom
                pltpu.VMEM((K, C), jnp.float32),   # f32 accumulator
            ],
        ),
        compiler_params=pltpu.CompilerParams(
            dimension_semantics=("parallel", "arbitrary"),
            vmem_limit_bytes=32 * 1024 * 1024,   # real footprint << 64 MiB (v7x-safe)
        ),
    )(probs_f, feats_f)

    # (B, K, C) -> (B, C, K, 1)  == torch .permute(0, 2, 1).unsqueeze(3).
    # Tiny tensor (B*K*C), negligible cost; kernel output stays lane-dense in C.
    return jnp.transpose(ctx, (0, 2, 1))[..., None]


def spatial_gather_module(feats, probs, cls_num=0, scale=1):
    """Mirror of SpatialGather_Module(cls_num, scale).forward(feats, probs)."""
    del cls_num  # stored but unused in the PyTorch forward
    return spatial_gather(feats, probs, scale=float(scale))


# --------------------------------- main ------------------------------------ #

if __name__ == "__main__":
    # Small shapes consistent with the module: feature maps (B, C, H, W) and
    # per-class probability maps (B, K, H, W) over the same spatial grid.
    B, C, K, H, W = 2, 128, 16, 16, 16

    key = jax.random.PRNGKey(0)
    k_feat, k_prob = jax.random.split(key)
    feats = jax.random.normal(k_feat, (B, C, H, W), jnp.float32)
    probs = jax.random.normal(k_prob, (B, K, H, W), jnp.float32)

    out = spatial_gather_module(feats, probs, cls_num=K, scale=1)
    out = jax.block_until_ready(out)
    assert out.shape == (B, C, K, 1), out.shape
    assert bool(jnp.all(jnp.isfinite(out)))

    # Pure-JAX reference (matches the PyTorch forward exactly, in f32).
    p_ref = jax.nn.softmax(1.0 * probs.reshape(B, K, H * W), axis=2)
    f_ref = feats.reshape(B, C, H * W)
    ref = jnp.einsum("bks,bcs->bck", p_ref, f_ref)[..., None]
    max_err = float(jnp.max(jnp.abs(out - ref)))
    assert max_err < 2e-2, f"max abs error {max_err}"

    print("KERNEL_OK")
</pallas_src>

<mosaic_0001>
module attributes {stable_mosaic.version = 11 : i64} {
  func.func @_spatial_gather_kernel(%arg0: i32, %arg1: i32, %arg2: memref<1x16x256xf32, #tpu.memory_space<vmem>>, %arg3: memref<1x128x256xbf16, #tpu.memory_space<vmem>>, %arg4: memref<1x16x128xf32, #tpu.memory_space<vmem>>, %arg5: memref<16x1xf32, #tpu.memory_space<vmem>>, %arg6: memref<16x1xf32, #tpu.memory_space<vmem>>, %arg7: memref<16x128xf32, #tpu.memory_space<vmem>>) attributes {dimension_semantics = [#tpu.dimension_semantics<parallel>, #tpu.dimension_semantics<arbitrary>], iteration_bounds = array<i64: 2, 1>, scalar_prefetch = 0 : i64, scratch_operands = 3 : i64, tpu.core_type = #tpu.core_type<tc>, window_params = [{transform_indices = @transform_0, window_bounds = array<i64: 1, 16, 256>}, {transform_indices = @transform_1, window_bounds = array<i64: 1, 128, 256>}, {transform_indices = @transform_2, window_bounds = array<i64: 1, 16, 128>}]} {
    %c0_i32 = arith.constant 0 : i32
    %0 = arith.cmpi eq, %arg1, %c0_i32 : i32
    %1 = arith.extui %0 : i1 to i32
    %c0_i32_0 = arith.constant 0 : i32
    %2 = arith.cmpi ne, %1, %c0_i32_0 : i32
    scf.if %2 {
      %cst_22 = arith.constant 0xFF800000 : f32
      %33 = vector.broadcast %cst_22 : f32 to vector<16x1xf32>
      %c0_23 = arith.constant 0 : index
      %c0_24 = arith.constant 0 : index
      %34 = vector.load %arg5[%c0_23, %c0_24] : memref<16x1xf32, #tpu.memory_space<vmem>>, vector<16x1xf32>
      tpu.vector_store %arg5[%c0_23, %c0_24], %33 {strides = array<i32>} : memref<16x1xf32, #tpu.memory_space<vmem>>, vector<16x1xf32>,
      %cst_25 = arith.constant 0.000000e+00 : f32
      %35 = vector.broadcast %cst_25 : f32 to vector<16x1xf32>
      %c0_26 = arith.constant 0 : index
      %c0_27 = arith.constant 0 : index
      %36 = vector.load %arg6[%c0_26, %c0_27] : memref<16x1xf32, #tpu.memory_space<vmem>>, vector<16x1xf32>
      tpu.vector_store %arg6[%c0_26, %c0_27], %35 {strides = array<i32>} : memref<16x1xf32, #tpu.memory_space<vmem>>, vector<16x1xf32>,
      %cst_28 = arith.constant 0.000000e+00 : f32
      %37 = vector.broadcast %cst_28 : f32 to vector<16x128xf32>
      %c0_29 = arith.constant 0 : index
      %c0_30 = arith.constant 0 : index
      %38 = vector.load %arg7[%c0_29, %c0_30] : memref<16x128xf32, #tpu.memory_space<vmem>>, vector<16x128xf32>
      tpu.vector_store %arg7[%c0_29, %c0_30], %37 {strides = array<i32>} : memref<16x128xf32, #tpu.memory_space<vmem>>, vector<16x128xf32>,
    } else {
    }
    %c0 = arith.constant 0 : index
    %c0_1 = arith.constant 0 : index
    %c0_2 = arith.constant 0 : index
    %3 = vector.load %arg2[%c0, %c0_1, %c0_2] : memref<1x16x256xf32, #tpu.memory_space<vmem>>, vector<1x16x256xf32>
    %4 = vector.shape_cast %3 : vector<1x16x256xf32> to vector<16x256xf32>
    %c0_3 = arith.constant 0 : index
    %c0_4 = arith.constant 0 : index
    %5 = vector.load %arg5[%c0_3, %c0_4] : memref<16x1xf32, #tpu.memory_space<vmem>>, vector<16x1xf32>
    %cst = arith.constant dense<0xFF800000> : vector<16xf32>
    %6 = vector.multi_reduction <maximumf>, %4, %cst [1] : vector<16x256xf32> to vector<16xf32>
    %7 = vector.shape_cast %6 : vector<16xf32> to vector<16x1xf32>
    %8 = arith.maximumf %5, %7 : vector<16x1xf32>
    %9 = arith.subf %5, %8 : vector<16x1xf32>
    %10 = math.exp %9 : vector<16x1xf32>
    %11 = vector.broadcast %8 : vector<16x1xf32> to vector<16x256xf32>
    %12 = arith.subf %4, %11 : vector<16x256xf32>
    %13 = math.exp %12 : vector<16x256xf32>
    %c0_5 = arith.constant 0 : index
    %c0_6 = arith.constant 0 : index
    %14 = vector.load %arg6[%c0_5, %c0_6] : memref<16x1xf32, #tpu.memory_space<vmem>>, vector<16x1xf32>
    %15 = arith.mulf %10, %14 : vector<16x1xf32>
    %cst_7 = arith.constant dense<0.000000e+00> : vector<16xf32>
    %16 = vector.multi_reduction <add>, %13, %cst_7 [1] : vector<16x256xf32> to vector<16xf32>
    %17 = vector.shape_cast %16 : vector<16xf32> to vector<16x1xf32>
    %18 = arith.addf %15, %17 : vector<16x1xf32>
    %c0_8 = arith.constant 0 : index
    %c0_9 = arith.constant 0 : index
    %19 = vector.load %arg6[%c0_8, %c0_9] : memref<16x1xf32, #tpu.memory_space<vmem>>, vector<16x1xf32>
    tpu.vector_store %arg6[%c0_8, %c0_9], %18 {strides = array<i32>} : memref<16x1xf32, #tpu.memory_space<vmem>>, vector<16x1xf32>,
    %20 = arith.truncf %13 : vector<16x256xf32> to vector<16x256xbf16>
    %c0_10 = arith.constant 0 : index
    %c0_11 = arith.constant 0 : index
    %c0_12 = arith.constant 0 : index
    %21 = vector.load %arg3[%c0_10, %c0_11, %c0_12] : memref<1x128x256xbf16, #tpu.memory_space<vmem>>, vector<1x128x256xbf16>
    %22 = vector.shape_cast %21 : vector<1x128x256xbf16> to vector<128x256xbf16>
    %cst_13 = arith.constant dense<0.000000e+00> : vector<16x128xf32>
    %23 = tpu.matmul %20, %22, %cst_13 {dimension_numbers = #tpu.dot_dimension_numbers<[1], [1], [0], [0], [0, 0, 1, 0], [], []>} : vector<16x256xbf16>, vector<128x256xbf16>, vector<16x128xf32> -> vector<16x128xf32>
    %c0_14 = arith.constant 0 : index
    %c0_15 = arith.constant 0 : index
    %24 = vector.load %arg7[%c0_14, %c0_15] : memref<16x128xf32, #tpu.memory_space<vmem>>, vector<16x128xf32>
    %25 = vector.broadcast %10 : vector<16x1xf32> to vector<16x128xf32>
    %26 = arith.mulf %25, %24 : vector<16x128xf32>
    %27 = arith.addf %26, %23 : vector<16x128xf32>
    %c0_16 = arith.constant 0 : index
    %c0_17 = arith.constant 0 : index
    %28 = vector.load %arg7[%c0_16, %c0_17] : memref<16x128xf32, #tpu.memory_space<vmem>>, vector<16x128xf32>
    tpu.vector_store %arg7[%c0_16, %c0_17], %27 {strides = array<i32>} : memref<16x128xf32, #tpu.memory_space<vmem>>, vector<16x128xf32>,
    %c0_18 = arith.constant 0 : index
    %c0_19 = arith.constant 0 : index
    %29 = vector.load %arg5[%c0_18, %c0_19] : memref<16x1xf32, #tpu.memory_space<vmem>>, vector<16x1xf32>
    tpu.vector_store %arg5[%c0_18, %c0_19], %8 {strides = array<i32>} : memref<16x1xf32, #tpu.memory_space<vmem>>, vector<16x1xf32>,
    %c0_i32_20 = arith.constant 0 : i32
    %30 = arith.cmpi eq, %arg1, %c0_i32_20 : i32
    %31 = arith.extui %30 : i1 to i32
    %c0_i32_21 = arith.constant 0 : i32
    %32 = arith.cmpi ne, %31, %c0_i32_21 : i32
    scf.if %32 {
      %c0_22 = arith.constant 0 : index
      %c0_23 = arith.constant 0 : index
      %33 = vector.load %arg6[%c0_22, %c0_23] : memref<16x1xf32, #tpu.memory_space<vmem>>, vector<16x1xf32>
      %34 = tpu.reciprocal %33 {approx = true} : vector<16x1xf32> -> vector<16x1xf32>
      %c0_24 = arith.constant 0 : index
      %c0_25 = arith.constant 0 : index
      %35 = vector.load %arg7[%c0_24, %c0_25] : memref<16x128xf32, #tpu.memory_space<vmem>>, vector<16x128xf32>
      %36 = vector.broadcast %34 : vector<16x1xf32> to vector<16x128xf32>
      %37 = arith.mulf %35, %36 : vector<16x128xf32>
      %c0_26 = arith.constant 0 : index
      %c0_27 = arith.constant 0 : index
      %c0_28 = arith.constant 0 : index
      %38 = vector.load %arg4[%c0_26, %c0_27, %c0_28] : memref<1x16x128xf32, #tpu.memory_space<vmem>>, vector<1x16x128xf32>
      %39 = vector.shape_cast %38 : vector<1x16x128xf32> to vector<16x128xf32>
      %40 = vector.shape_cast %37 : vector<16x128xf32> to vector<1x16x128xf32>
      tpu.vector_store %arg4[%c0_26, %c0_27, %c0_28], %40 {strides = array<i32>} : memref<1x16x128xf32, #tpu.memory_space<vmem>>, vector<1x16x128xf32>,
    } else {
    }
    return
  }
  func.func @transform_0(%arg0: i32, %arg1: i32) -> (i32, i32, i32) {
    %c0_i32 = arith.constant 0 : i32
    %c0_i32_0 = arith.constant 0 : i32
    return %arg0, %c0_i32, %arg1 : i32, i32, i32
  }
  func.func @transform_1(%arg0: i32, %arg1: i32) -> (i32, i32, i32) {
    %c0_i32 = arith.constant 0 : i32
    %c0_i32_0 = arith.constant 0 : i32
    return %arg0, %c0_i32, %arg1 : i32, i32, i32
  }
  func.func @transform_2(%arg0: i32, %arg1: i32) -> (i32, i32, i32) {
    %c0_i32 = arith.constant 0 : i32
    %c0_i32_0 = arith.constant 0 : i32
    %c0_i32_1 = arith.constant 0 : i32
    return %arg0, %c0_i32, %c0_i32_0 : i32, i32, i32
  }
}

</mosaic_0001>

<llo_original>
// kernel: tpu_custom_call.1
$region0: #{tpu_custom_call.1}
  #allocation0 [shape = 'u32[]', space=smem, size = 0x4, offset = 0x4, fixed_abs, tag = 'smem constant byte address 0x4 - core index']
  #allocation1 [shape = 'u32[144,128]{1,0:T(1,128)}', space=vmem, size = 0x12000, scoped, tag = 'internal scratch']
  #allocation2 [shape = 'f32[16,1]{1,0:T(8,128)}', space=vmem, size = 0x2000, scoped, tag = 'scratch operand']
  #allocation3 [shape = 'f32[16,1]{1,0:T(8,128)}', space=vmem, size = 0x2000, scoped, tag = 'scratch operand']
  #allocation4 [shape = 'f32[16,128]{1,0:T(8,128)}', space=vmem, size = 0x2000, scoped, tag = 'scratch operand']
  %s0 = inlined_call_operand.hbm [shape: f32[2,16,256], index: 0, kind: input, shape index: {}]
  %s1 = inlined_call_operand.hbm [shape: bf16[2,128,256], index: 1, kind: input, shape index: {}]
  %s2 = inlined_call_operand.hbm [shape: f32[2,16,128], index: 2, kind: output, shape index: {}]
  %s3 = sld [smem:[#allocation0]]
  $region57: #{tpu_custom_call.1} parent=0
    _
  %s5 = ssub.s32 1, %s3
  %s6 = scalar_select 0, %s5, %s3
  $region1: #{tpu_custom_call.1} parent=0
    #allocation5 [shape = 'u8[32768]{0}', space=vmem, size = 0x8000, scoped, tag = 'input window, operand 0']
    #allocation6 [shape = 's32[2]{0}', space=sflag, size = 0x8, scoped, tag = 'scoped memory for tpu_custom_call.1']
    #allocation7 [shape = 's32[2]{0}', space=sflag, size = 0x8, scoped, tag = 'scoped memory for tpu_custom_call.1']
    #allocation8 [shape = 'u8[131072]{0}', space=vmem, size = 0x20000, scoped, tag = 'input window, operand 1']
    #allocation9 [shape = 's32[2]{0}', space=sflag, size = 0x8, scoped, tag = 'scoped memory for tpu_custom_call.1']
    #allocation10 [shape = 'u8[16384]{0}', space=vmem, size = 0x4000, scoped, tag = 'output window, operand 0']
    %7 = vsyncpa [#allocation6], 0
    %s8 = scalar_lea.sflag [#allocation6], 1
    %9 = vsyncpa %s8, 0
    %10 = vsyncpa [#allocation9], 0
    %s11 = scalar_lea.sflag [#allocation9], 1
    %12 = vsyncpa %s11, 0
    %13 = vsyncpa [#allocation7], 0
    %s14 = scalar_lea.sflag [#allocation7], 1
    %15 = vsyncpa %s14, 0
    loop: start=0, step=1, limit=4
    $region2: #{tpu_custom_call.1} parent=1 // loop_pre_header
      _
    $region3: #{tpu_custom_call.1} parent=1 // loop_header
      %s17 = sphi 0, %s21
      %p18 = scmp.ge.s32.totalorder %s17, 4
      %s24 = sphi 0, %s36
      %s25 = sphi 0, %s32
      %s26 = sphi 0, %s24
      %s27 = sphi 0, %s25
      %s28 = sphi 0, %s26
      %s29 = sphi 0, %s27
      %s41 = sphi 0, %s43
      %s44 = sphi 0, %s41
      %s45 = sphi 0, %s44
      %s61 = sphi 0, %s45
      %s69 = sphi 0, %s71
      %s72 = sphi 0, %s69
      %s73 = sphi 0, %s72
      %s89 = sphi 0, %s73
      %s95 = sphi 0, %s97
      %s98 = sphi 0, %s95
      %s99 = sphi 0, %s98
      %s115 = sphi 0, %s99
    $region4: #{tpu_custom_call.1} parent=1 // loop_header_branch
      %20 = sbr.rel (%p18) target = $region8
    $region5: #{tpu_custom_call.1} parent=1 // loop_body
      %s22 = ssub.s32 %s17, 1
      %s23 = ssub.s32 %s17, 2
      %s30 = sadd.s32 1, %s25
      %p31 = scmp.ge.s32.totalorder %s30, 1
      %s32 = scalar_select %p31, 0, %s30
      %s33 = sadd.s32 1, %s24
      %s34 = scalar_select %p31, %s33, %s24
      %p35 = scmp.ge.s32.totalorder %s34, 2
      %s36 = scalar_select %p35, 0, %s34
      %s37 = ssub.s32 %s24, %s36
      %s38 = ssub.s32 %s25, %s32
      %s39 = sor.u32 %s37, %s38
      %p40 = scmp.eq.s32.totalorder %s39, 0
      %s42 = sadd.s32 %s41, 1
      %s43 = scalar_select %p40, %s41, %s42
      %p46 = pneg %p40
      %p47 = scmp.eq.s32.totalorder %s17, 1
      %p48 = por %p46, %p47
      %p49 = scmp.ne.s32.totalorder %s41, %s44
      %p50 = scmp.eq.s32.totalorder %s17, 0
      %p51 = por %p49, %p50
      %p52 = scmp.ne.s32.totalorder %s41, %s44
      %p53 = scmp.eq.s32.totalorder %s22, 1
      %p54 = por %p52, %p53
      %p55 = scmp.ne.s32.totalorder %s44, %s45
      %p56 = scmp.eq.s32.totalorder %s22, 0
      %p57 = por %p55, %p56
      %p58 = scmp.ne.s32.totalorder %s44, %s45
      %p59 = scmp.eq.s32.totalorder %s23, 1
      %p60 = por %p58, %p59
      %p62 = scmp.ne.s32.totalorder %s45, %s61
      %p63 = scmp.eq.s32.totalorder %s23, 0
      %p64 = por %p62, %p63
      %s65 = ssub.s32 %s24, %s36
      %s66 = ssub.s32 %s25, %s32
      %s67 = sor.u32 %s65, %s66
      %p68 = scmp.eq.s32.totalorder %s67, 0
      %s70 = sadd.s32 %s69, 1
      %s71 = scalar_select %p68, %s69, %s70
      %p74 = pneg %p68
      %p75 = scmp.eq.s32.totalorder %s17, 1
      %p76 = por %p74, %p75
      %p77 = scmp.ne.s32.totalorder %s69, %s72
      %p78 = scmp.eq.s32.totalorder %s17, 0
      %p79 = por %p77, %p78
      %p80 = scmp.ne.s32.totalorder %s69, %s72
      %p81 = scmp.eq.s32.totalorder %s22, 1
      %p82 = por %p80, %p81
      %p83 = scmp.ne.s32.totalorder %s72, %s73
      %p84 = scmp.eq.s32.totalorder %s22, 0
      %p85 = por %p83, %p84
      %p86 = scmp.ne.s32.totalorder %s72, %s73
      %p87 = scmp.eq.s32.totalorder %s23, 1
      %p88 = por %p86, %p87
      %p90 = scmp.ne.s32.totalorder %s73, %s89
      %p91 = scmp.eq.s32.totalorder %s23, 0
      %p92 = por %p90, %p91
      %s93 = ssub.s32 %s24, %s36
      %p94 = scmp.eq.s32.totalorder %s93, 0
      %s96 = sadd.s32 %s95, 1
      %s97 = scalar_select %p94, %s95, %s96
      %p100 = pneg %p94
      %p101 = scmp.eq.s32.totalorder %s17, 1
      %p102 = por %p100, %p101
      %p103 = scmp.ne.s32.totalorder %s95, %s98
      %p104 = scmp.eq.s32.totalorder %s17, 0
      %p105 = por %p103, %p104
      %p106 = scmp.ne.s32.totalorder %s95, %s98
      %p107 = scmp.eq.s32.totalorder %s22, 1
      %p108 = por %p106, %p107
      %p109 = scmp.ne.s32.totalorder %s98, %s99
      %p110 = scmp.eq.s32.totalorder %s22, 0
      %p111 = por %p109, %p110
      %p112 = scmp.ne.s32.totalorder %s98, %s99
      %p113 = scmp.eq.s32.totalorder %s23, 1
      %p114 = por %p112, %p113
      %p116 = scmp.ne.s32.totalorder %s99, %s115
      %p117 = scmp.eq.s32.totalorder %s23, 0
      %p118 = por %p116, %p117
      %p119 = scmp.le.s32.totalorder 1, %s17
      %p120 = scmp.lt.s32.totalorder %s17, 3
      %p121 = pnand %p119, %p120
      %p122 = pneg %p121
      // Predicated region
      $region9: #{tpu_custom_call.1} parent=5 // pred_check
        _
      $region10: #{tpu_custom_call.1} parent=5 // pred_check_branch
        %124 = sbr.rel (%p121) target = $region12
      $region11: #{tpu_custom_call.1} parent=5 // pred_region
        %s125 = ssub.s32 %s17, 1
      $region12: #{tpu_custom_call.1} parent=5 // pred_fallthru
        _
      %p126 = scmp.lt.s32.totalorder %s17, 2
      // Predicated region
      $region13: #{tpu_custom_call.1} parent=5 // pred_check
        %p127 = pneg %p126
      $region14: #{tpu_custom_call.1} parent=5 // pred_check_branch
        %129 = sbr.rel (%p127) target = $region16
      $region15: #{tpu_custom_call.1} parent=5 // pred_region
        // Predicated region
        $region17: #{tpu_custom_call.1} parent=15 // pred_check
          %p130 = pneg %p51
        $region18: #{tpu_custom_call.1} parent=15 // pred_check_branch
          %132 = sbr.rel (%p130) target = $region20
        $region19: #{tpu_custom_call.1} parent=15 // pred_region
          %s133 = sand.u32 %s41, 1
          %s134 = scalar_lea.sflag [#allocation6], %s133
          %s135 = sand.u32 %s41, 1
          %s136 = smul.addr %s135, 32
          %s137 = scalar_lea.vmem [#allocation5], %s136
          %s138 = smul.u32 2, %s25
          %s140 = ssub.s32 512, 512
          %141 = vsyncadd %s134, %s140
          %s142 = smul.addr %s24, 4
          %s143 = sadd.s32 %s138, %s142
          %s144 = smul.addr %s143, 128
          %s145 = scalar_lea.hbm %s0, %s144
          %s146 = sshll.u32 %s137, 4
          %s147 = int_to_ptr.vmem [resolvable:$true] %s146
          %152 = dma.hbm_to_vmem [thread:$0]  %s145, 512, %s147, %s134, 256, 256, 16
        $region20: #{tpu_custom_call.1} parent=15 // pred_fallthru
          _
        // Predicated region
        $region21: #{tpu_custom_call.1} parent=15 // pred_check
          %p153 = pneg %p79
        $region22: #{tpu_custom_call.1} parent=15 // pred_check_branch
          %155 = sbr.rel (%p153) target = $region24
        $region23: #{tpu_custom_call.1} parent=15 // pred_region
          %s156 = sand.u32 %s69, 1
          %s157 = scalar_lea.sflag [#allocation9], %s156
          %s158 = sand.u32 %s69, 1
          %s159 = smul.addr %s158, 128
          %s160 = scalar_lea.vmem [#allocation8], %s159
          %s161 = smul.u32 2, %s25
          %s163 = ssub.s32 2048, 2048
          %164 = vsyncadd %s157, %s163
          %s165 = smul.addr %s24, 32
          %s166 = sadd.s32 %s161, %s165
          %s167 = smul.addr %s166, 64
          %s168 = scalar_lea.hbm %s1, %s167
          %s169 = sshll.u32 %s160, 4
          %s170 = int_to_ptr.vmem [resolvable:$true] %s169
          %175 = dma.hbm_to_vmem [thread:$0]  %s168, 2048, %s170, %s157, 128, 128, 8
        $region24: #{tpu_custom_call.1} parent=15 // pred_fallthru
          _
      $region16: #{tpu_custom_call.1} parent=5 // pred_fallthru
        _
      %p176 = scmp.le.s32.totalorder 1, %s17
      %p177 = scmp.lt.s32.totalorder %s17, 3
      %p178 = pnand %p176, %p177
      %p179 = pneg %p178
      // Predicated region
      $region25: #{tpu_custom_call.1} parent=5 // pred_check
        _
      $region26: #{tpu_custom_call.1} parent=5 // pred_check_branch
        %181 = sbr.rel (%p178) target = $region28
      $region27: #{tpu_custom_call.1} parent=5 // pred_region
        %s182 = ssub.s32 %s17, 1
        %s183 = sand.u32 %s44, 1
        %s184 = scalar_lea.sflag [#allocation6], %s183
        %s185 = sand.u32 %s44, 1
        %s186 = smul.addr %s185, 32
        %s187 = scalar_lea.vmem [#allocation5], %s186
        // Predicated region
        $region29: #{tpu_custom_call.1} parent=27 // pred_check
          %p188 = pneg %p57
        $region30: #{tpu_custom_call.1} parent=27 // pred_check_branch
          %190 = sbr.rel (%p188) target = $region32
        $region31: #{tpu_custom_call.1} parent=27 // pred_region
          %191 = dma.done %s184, 512
        $region32: #{tpu_custom_call.1} parent=27 // pred_fallthru
          _
        %s192 = sand.u32 %s72, 1
        %s193 = scalar_lea.sflag [#allocation9], %s192
        %s194 = sand.u32 %s72, 1
        %s195 = smul.addr %s194, 128
        %s196 = scalar_lea.vmem [#allocation8], %s195
        // Predicated region
        $region33: #{tpu_custom_call.1} parent=27 // pred_check
          %p197 = pneg %p85
        $region34: #{tpu_custom_call.1} parent=27 // pred_check_branch
          %199 = sbr.rel (%p197) target = $region36
        $region35: #{tpu_custom_call.1} parent=27 // pred_region
          %200 = dma.done %s193, 2048
        $region36: #{tpu_custom_call.1} parent=27 // pred_fallthru
          _
        %s201 = sand.u32 %s44, 1
        %s202 = scalar_lea.sflag [#allocation6], %s201
        %s203 = sand.u32 %s44, 1
        %s204 = smul.addr %s203, 32
        %s205 = scalar_lea.vmem [#allocation5], %s204
        %p206 = pneg %p57
        %p207 = pneg %p54
        %s208 = sand.u32 %s72, 1
        %s209 = scalar_lea.sflag [#allocation9], %s208
        %s210 = sand.u32 %s72, 1
        %s211 = smul.addr %s210, 128
        %s212 = scalar_lea.vmem [#allocation8], %s211
        %p213 = pneg %p85
        %p214 = pneg %p82
        %p215 = pneg %p111
        %p216 = pneg %p108
        %s217 = sand.u32 %s98, 1
        %s218 = scalar_lea.sflag [#allocation7], %s217
        %s219 = sand.u32 %s98, 1
        %s220 = smul.addr %s219, 16
        %s221 = scalar_lea.vmem [#allocation10], %s220
        %s222 = smul.u32 2, %s27
        %s223 = smul.u32 2, %s27
        %p225 = scmp.eq.s32.totalorder %s27, 0
        // Predicated region
        $region37: #{tpu_custom_call.1} parent=27 // pred_check
          %p226 = pneg %p225
        $region38: #{tpu_custom_call.1} parent=27 // pred_check_branch
          %228 = sbr.rel (%p226) target = $region40
        $region39: #{tpu_custom_call.1} parent=27 // pred_region
          %vm229 = vcmask 7168
          %230 = vst.msk [vmem:[#allocation2] sm:$0xff] %vm229, -inf
          %231 = vst.msk [vmem:[#allocation2 + $0x8] sm:$0xff] %vm229, -inf
          %232 = vst.msk [vmem:[#allocation3] sm:$0xff] %vm229, 0.0
          %233 = vst.msk [vmem:[#allocation3 + $0x8] sm:$0xff] %vm229, 0.0
          %234 = vst [vmem:[#allocation4] sm:$0xff] 0.0
          %235 = vst [vmem:[#allocation4 + $0x8] sm:$0xff] 0.0
        $region40: #{tpu_custom_call.1} parent=27 // pred_fallthru
          _
        %v236 = vld [vmem:[%s187] sm:$0xff]
        %v237 = vld [vmem:[%s187 + $0x8] sm:$0xff]
        %v238 = vld [vmem:[%s187 + $0x10] sm:$0xff]
        %v239 = vld [vmem:[%s187 + $0x18] sm:$0xff]
        %v240 = vld [vmem:[#allocation2] sm:$0xff]
        %v241 = vld [vmem:[#allocation2 + $0x8] sm:$0xff]
        %v242 = vmax.f32 %v236, %v237
        %243 = vmax.xlane.f32.xlu0 %v242
        %v244 = vpop.xlane.xlu0 %243
        %v245 = vmax.f32 %v238, %v239
        %246 = vmax.xlane.f32.xlu0 %v245
        %v247 = vpop.xlane.xlu0 %246
        %v248 = vmax.f32 %v240, %v244
        %v249 = vmax.f32 %v241, %v247
        %v250 = vsub.f32 %v240, %v248
        %v251 = vsub.f32 %v241, %v249
        %v252 = vmul.f32 %v250, 1.442695
        %v253 = vpow.pop %v252
        %v254 = vmul.f32 %v251, 1.442695
        %v255 = vpow.pop %v254
        %257 = vset.pattern.permute.xlu0 0
        %258 = vperm.xlu0 %257, %v248
        %v259 = vpop.permute.xlu0 %258
        %262 = vset.pattern.permute.xlu0 0
        %263 = vperm.xlu0 %262, %v249
        %v264 = vpop.permute.xlu0 %263
        %v266 = vsub.f32 %v236, %v259
        %v267 = vsub.f32 %v237, %v259
        %v268 = vsub.f32 %v238, %v264
        %v269 = vsub.f32 %v239, %v264
        %v270 = vmul.f32 %v266, 1.442695
        %v271 = vpow.pop %v270
        %v272 = vmul.f32 %v267, 1.442695
        %v273 = vpow.pop %v272
        %v274 = vmul.f32 %v268, 1.442695
        %v275 = vpow.pop %v274
        %v276 = vmul.f32 %v269, 1.442695
        %v277 = vpow.pop %v276
        %v278 = vld [vmem:[#allocation3] sm:$0xff]
        %v279 = vld [vmem:[#allocation3 + $0x8] sm:$0xff]
        %v280 = vmul.f32 %v253, %v278
        %v281 = vmul.f32 %v255, %v279
        %v282 = vadd.f32 %v271, %v273
        %283 = vadd.xlane.f32.xlu0 %v282
        %v284 = vpop.xlane.xlu0 %283
        %v285 = vadd.f32 %v275, %v277
        %286 = vadd.xlane.f32.xlu0 %v285
        %v287 = vpop.xlane.xlu0 %286
        %v288 = vadd.f32 %v280, %v284
        %v289 = vadd.f32 %v281, %v287
        %vm290 = vcmask 7168
        %291 = vst.msk [vmem:[#allocation3] sm:$0xff] %vm290, %v288
        %292 = vst.msk [vmem:[#allocation3 + $0x8] sm:$0xff] %vm290, %v289
        %v293 = vpack.c.bf16 %v275, %v271
        %v294 = vpack.c.bf16 %v277, %v273
        %v295 = vld [vmem:[%s196] sm:$0xff]
        %v296 = vld [vmem:[%s196 + $0x8] sm:$0xff]
        %v297 = vld [vmem:[%s196 + $0x10] sm:$0xff]
        %v298 = vld [vmem:[%s196 + $0x18] sm:$0xff]
        %v299 = vld [vmem:[%s196 + $0x20] sm:$0xff]
        %v300 = vld [vmem:[%s196 + $0x28] sm:$0xff]
        %v301 = vld [vmem:[%s196 + $0x30] sm:$0xff]
        %v302 = vld [vmem:[%s196 + $0x38] sm:$0xff]
        %v303 = vld [vmem:[%s196 + $0x40] sm:$0xff]
        %v304 = vld [vmem:[%s196 + $0x48] sm:$0xff]
        %v305 = vld [vmem:[%s196 + $0x50] sm:$0xff]
        %v306 = vld [vmem:[%s196 + $0x58] sm:$0xff]
        %v307 = vld [vmem:[%s196 + $0x60] sm:$0xff]
        %v308 = vld [vmem:[%s196 + $0x68] sm:$0xff]
        %v309 = vld [vmem:[%s196 + $0x70] sm:$0xff]
        %v310 = vld [vmem:[%s196 + $0x78] sm:$0xff]
        %v327 = vunpack.c.l.b16 %v295
        %v328 = vunpack.c.h.b16 %v295
        %v329 = vunpack.c.l.b16 %v296
        %v330 = vunpack.c.h.b16 %v296
        %v331 = vunpack.c.l.b16 %v297
        %v332 = vunpack.c.h.b16 %v297
        %v333 = vunpack.c.l.b16 %v298
        %v334 = vunpack.c.h.b16 %v298
        %v335 = vunpack.c.l.b16 %v299
        %v336 = vunpack.c.h.b16 %v299
        %v337 = vunpack.c.l.b16 %v300
        %v338 = vunpack.c.h.b16 %v300
        %v339 = vunpack.c.l.b16 %v301
        %v340 = vunpack.c.h.b16 %v301
        %v341 = vunpack.c.l.b16 %v302
        %v342 = vunpack.c.h.b16 %v302
        %v343 = vunpack.c.l.b16 %v303
        %v344 = vunpack.c.h.b16 %v303
        %v345 = vunpack.c.l.b16 %v304
        %v346 = vunpack.c.h.b16 %v304
        %v347 = vunpack.c.l.b16 %v305
        %v348 = vunpack.c.h.b16 %v305
        %v349 = vunpack.c.l.b16 %v306
        %v350 = vunpack.c.h.b16 %v306
        %v351 = vunpack.c.l.b16 %v307
        %v352 = vunpack.c.h.b16 %v307
        %v353 = vunpack.c.l.b16 %v308
        %v354 = vunpack.c.h.b16 %v308
        %v355 = vunpack.c.l.b16 %v309
        %v356 = vunpack.c.h.b16 %v309
        %v357 = vunpack.c.l.b16 %v310
        %v358 = vunpack.c.h.b16 %v310
        %v359 = vpack.c.b16 %v329, %v327
        %v360 = vpack.c.b16 %v330, %v328
        %v361 = vpack.c.b16 %v333, %v331
        %v362 = vpack.c.b16 %v334, %v332
        %v363 = vpack.c.b16 %v337, %v335
        %v364 = vpack.c.b16 %v338, %v336
        %v365 = vpack.c.b16 %v341, %v339
        %v366 = vpack.c.b16 %v342, %v340
        %v367 = vpack.c.b16 %v345, %v343
        %v368 = vpack.c.b16 %v346, %v344
        %v369 = vpack.c.b16 %v349, %v347
        %v370 = vpack.c.b16 %v350, %v348
        %v371 = vpack.c.b16 %v353, %v351
        %v372 = vpack.c.b16 %v354, %v352
        %v373 = vpack.c.b16 %v357, %v355
        %v374 = vpack.c.b16 %v358, %v356
        %391 = vmatprep.subr.bf16.mxu0 %v374
        %392 = vmatpush1.bf16.xpose.msra.mxu0 %v373
        %393 = vmatprep.subr.bf16.mxu0 %v372
        %394 = vmatpush1.bf16.xpose.msra.mxu0 %v371
        %395 = vmatprep.subr.bf16.mxu0 %v370
        %396 = vmatpush1.bf16.xpose.msra.mxu0 %v369
        %397 = vmatprep.subr.bf16.mxu0 %v368
        %398 = vmatpush1.bf16.xpose.msra.mxu0 %v367
        %399 = vmatprep.subr.bf16.mxu0 %v366
        %400 = vmatpush1.bf16.xpose.msra.mxu0 %v365
        %401 = vmatprep.subr.bf16.mxu0 %v364
        %402 = vmatpush1.bf16.xpose.msra.mxu0 %v363
        %403 = vmatprep.subr.bf16.mxu0 %v362
        %404 = vmatpush1.bf16.xpose.msra.mxu0 %v361
        %405 = vmatprep.subr.bf16.mxu0 %v360
        %406 = vmatpush1.bf16.xpose.msra.mxu0 %v359
        %407 = vmatprep.subr.bf16.mxu0 0
        %408 = vmatpush2.bf16.xpose.msra.mxu0 0
        %409 = vmatprep.subr.bf16.mxu0 0
        %410 = vmatpush2.bf16.xpose.msra.mxu0 0
        %411 = vmatprep.subr.bf16.mxu0 0
        %412 = vmatpush2.bf16.xpose.msra.mxu0 0
        %413 = vmatprep.subr.bf16.mxu0 0
        %414 = vmatpush2.bf16.xpose.msra.mxu0 0
        %415 = vmatprep.subr.bf16.mxu0 0
        %416 = vmatpush2.bf16.xpose.msra.mxu0 0
        %417 = vmatprep.subr.bf16.mxu0 0
        %418 = vmatpush2.bf16.xpose.msra.mxu0 0
        %419 = vmatprep.subr.bf16.mxu0 0
        %420 = vmatpush2.bf16.xpose.msra.mxu0 0
        %421 = vmatprep.subr.bf16.mxu0 0
        %422 = vmatpush2.bf16.xpose.msra.mxu0 0
        %423 = vmatprep.mubr.bf16.mxu0 %v294
        %424 = vmatmul.mubr.bf16.gmra.mxu0 %v293
        %v425 = vpop.f32.mrf.mxu0
        %v426 = vadd.f32 0.0, %v425
        %v427 = vpop.f32.mrf.mxu0
        %v428 = vpop.f32.mrf.mxu0
        %v429 = vadd.f32 0.0, %v428
        %v430 = vpop.f32.mrf.mxu0
        %431 = vdwg.mxu0
        %v432 = vld [vmem:[#allocation4] sm:$0xff]
        %v433 = vld [vmem:[#allocation4 + $0x8] sm:$0xff]
        %435 = vset.pattern.permute.xlu0 0
        %436 = vperm.xlu0 %435, %v253
        %v437 = vpop.permute.xlu0 %436
        %440 = vset.pattern.permute.xlu0 0
        %441 = vperm.xlu0 %440, %v255
        %v442 = vpop.permute.xlu0 %441
        %v444 = vmul.f32 %v437, %v432
        %v445 = vmul.f32 %v442, %v433
        %v446 = vadd.f32 %v444, %v426
        %v447 = vadd.f32 %v445, %v429
        %448 = vst [vmem:[#allocation4] sm:$0xff] %v446
        %449 = vst [vmem:[#allocation4 + $0x8] sm:$0xff] %v447
        %450 = vst.msk [vmem:[#allocation2] sm:$0xff] %vm290, %v248
        %451 = vst.msk [vmem:[#allocation2 + $0x8] sm:$0xff] %vm290, %v249
        // Predicated region
        $region41: #{tpu_custom_call.1} parent=27 // pred_check
          %p452 = pneg %p225
        $region42: #{tpu_custom_call.1} parent=27 // pred_check_branch
          %454 = sbr.rel (%p452) target = $region44
        $region43: #{tpu_custom_call.1} parent=27 // pred_region
          %v455 = vld [vmem:[#allocation3] sm:$0xff]
          %v456 = vld [vmem:[#allocation3 + $0x8] sm:$0xff]
          %v457 = vrcp.pop %v455
          %v458 = vrcp.pop %v456
          %v459 = vld [vmem:[#allocation4] sm:$0xff]
          %v460 = vld [vmem:[#allocation4 + $0x8] sm:$0xff]
          %462 = vset.pattern.permute.xlu0 0
          %463 = vperm.xlu0 %462, %v457
          %v464 = vpop.permute.xlu0 %463
          %467 = vset.pattern.permute.xlu0 0
          %468 = vperm.xlu0 %467, %v458
          %v469 = vpop.permute.xlu0 %468
          %v471 = vmul.f32 %v459, %v464
          %v472 = vmul.f32 %v460, %v469
          %473 = vst [vmem:[%s221] sm:$0xff] %v471
          %474 = vst [vmem:[%s221 + $0x8] sm:$0xff] %v472
        $region44: #{tpu_custom_call.1} parent=27 // pred_fallthru
          _
        %s475 = sand.u32 %s98, 1
        %s476 = scalar_lea.sflag [#allocation7], %s475
        %s477 = sand.u32 %s98, 1
        %s478 = smul.addr %s477, 16
        %s479 = scalar_lea.vmem [#allocation10], %s478
        // Predicated region
        $region45: #{tpu_custom_call.1} parent=27 // pred_check
          %p480 = pneg %p108
        $region46: #{tpu_custom_call.1} parent=27 // pred_check_branch
          %482 = sbr.rel (%p480) target = $region48
        $region47: #{tpu_custom_call.1} parent=27 // pred_region
          %s484 = ssub.s32 256, 256
          %485 = vsyncadd %s476, %s484
          %s486 = smul.addr %s26, 2
          %s487 = smul.addr %s486, 128
          %s488 = scalar_lea.hbm %s2, %s487
          %s489 = sshll.u32 %s479, 4
          %s490 = int_to_ptr.vmem [resolvable:$true] %s489
          %495 = dma.vmem_to_hbm [thread:$0]  %s490, 256, %s488, %s476, 128, 128, 8
        $region48: #{tpu_custom_call.1} parent=27 // pred_fallthru
          _
      $region28: #{tpu_custom_call.1} parent=5 // pred_fallthru
        _
      %p496 = scmp.le.s32.totalorder 2, %s17
      // Predicated region
      $region49: #{tpu_custom_call.1} parent=5 // pred_check
        %p497 = pneg %p496
      $region50: #{tpu_custom_call.1} parent=5 // pred_check_branch
        %499 = sbr.rel (%p497) target = $region52
      $region51: #{tpu_custom_call.1} parent=5 // pred_region
        %s500 = ssub.s32 %s17, 2
        // Predicated region
        $region53: #{tpu_custom_call.1} parent=51 // pred_check
          %p501 = pneg %p114
        $region54: #{tpu_custom_call.1} parent=51 // pred_check_branch
          %503 = sbr.rel (%p501) target = $region56
        $region55: #{tpu_custom_call.1} parent=51 // pred_region
          %s504 = sand.u32 %s99, 1
          %s505 = scalar_lea.sflag [#allocation7], %s504
          %s506 = sand.u32 %s99, 1
          %s507 = smul.addr %s506, 16
          %s508 = scalar_lea.vmem [#allocation10], %s507
          %509 = dma.done %s505, 256
        $region56: #{tpu_custom_call.1} parent=51 // pred_fallthru
          _
      $region52: #{tpu_custom_call.1} parent=5 // pred_fallthru
        _
    $region6: #{tpu_custom_call.1} parent=1 // loop_footer
      %s21 = sadd.s32 1, %s17
    $region7: #{tpu_custom_call.1} parent=1 // loop_footer_branch
      %16 = sbr.rel target = $region3
    $region8: #{tpu_custom_call.1} parent=1 // loop_exit
      _
    %510 = vsyncpa [#allocation6], 1
    %s511 = scalar_lea.sflag [#allocation6], 1
    %512 = vsyncpa %s511, 1
    %513 = vsyncpa [#allocation9], 1
    %s514 = scalar_lea.sflag [#allocation9], 1
    %515 = vsyncpa %s514, 1
    %516 = vsyncpa [#allocation7], 1
    %s517 = scalar_lea.sflag [#allocation7], 1
    %518 = vsyncpa %s517, 1

</llo_original>
